<compile_context>
chip_gen: v7x
topology: tpu7x:2x2x1
jax: 0.10.0
libtpu: 0.0.40
codegen_flags: <defaults>
</compile_context>

<pallas_src>
import functools

import numpy as np
import jax
import jax.numpy as jnp
from jax.experimental import pallas as pl
from jax.experimental.pallas import tpu as pltpu


# ----------------------------- tap construction -----------------------------

def sobel_weights(kernel_size):
    """Numpy replica of the PyTorch `sobel()` (incl. negative-index wraparound)."""
    assert kernel_size in (3, 5, 7)
    ind = kernel_size // 2
    matx = np.zeros((kernel_size, kernel_size), np.float32)
    maty = np.zeros((kernel_size, kernel_size), np.float32)
    for j in range(-ind, ind + 1):
        for i in range(-ind, ind + 1):
            if i * i + j * j > 0:
                matx[j][i] = i / (i * i + j * j)   # negative indices wrap, same as torch
                maty[j][i] = j / (i * i + j * j)
    mult = {3: 2.0, 5: 20.0, 7: 780.0}[kernel_size]
    return matx * mult, maty * mult


def _make_taps(kx, ky, K):
    taps = []
    for r in range(K):
        for c in range(K):
            wx = float(kx[r, c])
            wy = float(ky[r, c])
            if wx != 0.0 or wy != 0.0:     # skip all-zero taps (e.g. the centre)
                taps.append((r, c, wx, wy))
    return taps


# --------------------------------- kernels ----------------------------------

def _compute_grads(x_ref, spad_ref, taps, Bn, C, H, W, p):
    """Channel-sum -> zero-padded scratch -> 2D cross-correlation (f32)."""
    # Channel sum, one plane at a time (keeps vreg pressure at ~1 plane).
    s = x_ref[:, 0:1, :, :].astype(jnp.float32)
    for cc in range(1, C):
        s = s + x_ref[:, cc:cc + 1, :, :].astype(jnp.float32)

    # In-kernel zero padding into a *tight* (H+2p, W+2p) scratch: zero only the
    # <= p-wide border strips the taps read, then store the sum into the centre.
    zrow = jnp.zeros((Bn, 1, p, W + 2 * p), jnp.float32)
    zcol = jnp.zeros((Bn, 1, H, p), jnp.float32)
    spad_ref[:, :, 0:p, :] = zrow                              # top rows
    spad_ref[:, :, p + H:p + H + p, :] = zrow                  # bottom rows
    spad_ref[:, :, p:p + H, 0:p] = zcol                        # left cols
    spad_ref[:, :, p:p + H, p + W:p + W + p] = zcol            # right cols
    spad_ref[:, :, p:p + H, p:p + W] = s                       # centre

    accx = jnp.zeros((Bn, 1, H, W), jnp.float32)
    accy = jnp.zeros((Bn, 1, H, W), jnp.float32)
    # Each shifted patch is read straight from the VMEM ref (the full padded
    # plane is never a single live vreg value).  Static, fully unrolled.
    for r, c, wx, wy in taps:
        patch = spad_ref[:, :, r:r + H, c:c + W]
        if wx != 0.0:
            accx = accx + wx * patch
        if wy != 0.0:
            accy = accy + wy * patch
    return accx, accy


def _kernel_c1(x_ref, gx_ref, gy_ref, spad_ref, *, taps, Bn, H, W, p):
    # C == 1 fast path: no channel fan-out, no accumulator scratch.
    accx, accy = _compute_grads(x_ref, spad_ref, taps, Bn, 1, H, W, p)
    gx_ref[...] = accx.astype(gx_ref.dtype)
    gy_ref[...] = accy.astype(gy_ref.dtype)


def _kernel_cn(x_ref, gx_ref, gy_ref, spad_ref, accx_ref, accy_ref,
               *, taps, Bn, C, H, W, p):
    # x_ref    : (Bn, C, H, W) input block (resident across the c axis)
    # gx/gy_ref: (Bn, 1, H, W) per-channel output blocks
    # spad_ref : (Bn, 1, H+2p, W+2p) zero-padded channel sum
    # accx/accy: (Bn, 1, H, W) gradients (out dtype), persist across the c axis
    ci = pl.program_id(1)

    @pl.when(ci == 0)
    def _compute():
        accx, accy = _compute_grads(x_ref, spad_ref, taps, Bn, C, H, W, p)
        accx_ref[...] = accx.astype(accx_ref.dtype)
        accy_ref[...] = accy.astype(accy_ref.dtype)

    # Every channel writes the same gradient plane (pure copy, no cast since
    # the scratch already holds the output dtype).
    # TODO(synk): move this fan-out copy off the vector slots via a local DMA.
    gx_ref[...] = accx_ref[...]
    gy_ref[...] = accy_ref[...]


# ------------------------------ VMEM budgeting -------------------------------

def _round_up(v, m):
    return -(-v // m) * m


def _plane_bytes(rows, cols, itemsize):
    # (8, 128)-tile padded footprint of one 2D plane.
    return _round_up(rows, 8) * _round_up(cols, 128) * itemsize


def _per_step_vmem_bytes(Bn, C, H, W, p, itemsize):
    in_b = 2 * Bn * C * _plane_bytes(H, W, itemsize)       # input, double-buffered
    out_b = 2 * 2 * Bn * _plane_bytes(H, W, itemsize)      # gx, gy, double-buffered
    spad_b = Bn * _plane_bytes(H + 2 * p, W + 2 * p, 4)    # padded-sum scratch (f32)
    acc_b = 0 if C == 1 else 2 * Bn * _plane_bytes(H, W, itemsize)
    return in_b + out_b + spad_b + acc_b


def _vmem_capacity_bytes():
    try:
        info = pltpu.get_tpu_info()
        cap = getattr(info, "vmem_capacity_bytes", None)
        if cap:
            return int(cap)
    except Exception:
        pass
    return 64 * 1024 * 1024        # conservative fallback (v7x per-TC VMEM)


def _choose_batch_block(N, C, H, W, p, itemsize, budget):
    """Images per grid step: amortize per-step overhead, stay inside VMEM."""
    target_in = 4 * 1024 * 1024    # aim for a few MiB of input traffic per step
    bn_cap = max(1, N // 2)        # keep >= 2 grid steps so both v7x TCs get work
    best = 1
    for bn in range(1, bn_cap + 1):
        if N % bn != 0:
            continue
        if _per_step_vmem_bytes(bn, C, H, W, p, itemsize) > budget:
            break
        best = bn
        if bn * C * _plane_bytes(H, W, itemsize) >= target_in:
            break
    return best


# --------------------------------- wrapper -----------------------------------

def sobel_grad(x, kernel_size=3):
    """Pallas implementation of SobelGrad.forward. x: (N, C, H, W)."""
    N, C, H, W = x.shape
    p = kernel_size // 2
    kx, ky = sobel_weights(kernel_size)
    taps = _make_taps(kx, ky, kernel_size)
    itemsize = jnp.dtype(x.dtype).itemsize

    cap = _vmem_capacity_bytes()
    if cap >= 100 * 1024 * 1024:            # v5e / v6e: 128 MiB VMEM
        budget = 96 * 1024 * 1024
        limit_cap = min(110 * 1024 * 1024, cap - 12 * 1024 * 1024)
    else:                                   # v7x: 64 MiB per TensorCore
        budget = 36 * 1024 * 1024
        limit_cap = min(52 * 1024 * 1024, cap - 12 * 1024 * 1024)

    Bn = _choose_batch_block(N, C, H, W, p, itemsize, budget)
    Nb = N // Bn

    per_step = _per_step_vmem_bytes(Bn, C, H, W, p, itemsize)
    vmem_limit = int(min(max(per_step + (4 << 20), 32 << 20), limit_cap))

    out_shape = jax.ShapeDtypeStruct((N, C, H, W), x.dtype)
    spad = pltpu.VMEM((Bn, 1, H + 2 * p, W + 2 * p), jnp.float32)

    # TODO(synk): single images whose Bn=1 block exceeds the VMEM budget would
    # additionally need an H-row tile grid axis with a (K-1)-row halo.

    if C == 1:
        kern = functools.partial(_kernel_c1, taps=taps, Bn=Bn, H=H, W=W, p=p)
        gx, gy = pl.pallas_call(
            kern,
            out_shape=(out_shape, out_shape),
            grid=(Nb,),
            in_specs=[pl.BlockSpec((Bn, 1, H, W), lambda nb: (nb, 0, 0, 0))],
            out_specs=(
                pl.BlockSpec((Bn, 1, H, W), lambda nb: (nb, 0, 0, 0)),
                pl.BlockSpec((Bn, 1, H, W), lambda nb: (nb, 0, 0, 0)),
            ),
            scratch_shapes=[spad],
            compiler_params=pltpu.CompilerParams(
                dimension_semantics=("parallel",),
                vmem_limit_bytes=vmem_limit,
            ),
        )(x)
    else:
        kern = functools.partial(_kernel_cn, taps=taps, Bn=Bn, C=C, H=H, W=W, p=p)
        gx, gy = pl.pallas_call(
            kern,
            out_shape=(out_shape, out_shape),
            grid=(Nb, C),
            in_specs=[
                # index_map ignores the channel axis -> the input block stays
                # resident in VMEM while the result fans out over channels.
                pl.BlockSpec((Bn, C, H, W), lambda nb, c: (nb, 0, 0, 0)),
            ],
            out_specs=(
                pl.BlockSpec((Bn, 1, H, W), lambda nb, c: (nb, c, 0, 0)),
                pl.BlockSpec((Bn, 1, H, W), lambda nb, c: (nb, c, 0, 0)),
            ),
            scratch_shapes=[
                spad,
                pltpu.VMEM((Bn, 1, H, W), x.dtype),
                pltpu.VMEM((Bn, 1, H, W), x.dtype),
            ],
            compiler_params=pltpu.CompilerParams(
                # The c axis must stay sequential: gradients are computed once
                # at c == 0 and re-used from scratch for c > 0.
                dimension_semantics=("parallel", "arbitrary"),
                vmem_limit_bytes=vmem_limit,
            ),
        )(x)
    return gx, gy


# -------------------------------- reference ----------------------------------

def reference_sobel_grad(x, kernel_size=3):
    """Pure-JAX reference matching F.conv2d with the repeated window."""
    N, C, H, W = x.shape
    p = kernel_size >> 1
    kx, ky = sobel_weights(kernel_size)
    wx = jnp.broadcast_to(jnp.asarray(kx)[None, None], (C, C, kernel_size, kernel_size))
    wy = jnp.broadcast_to(jnp.asarray(ky)[None, None], (C, C, kernel_size, kernel_size))
    dn = jax.lax.conv_dimension_numbers(x.shape, wx.shape, ("NCHW", "OIHW", "NCHW"))
    gx = jax.lax.conv_general_dilated(x, wx, (1, 1), ((p, p), (p, p)),
                                      dimension_numbers=dn,
                                      precision=jax.lax.Precision.HIGHEST)
    gy = jax.lax.conv_general_dilated(x, wy, (1, 1), ((p, p), (p, p)),
                                      dimension_numbers=dn,
                                      precision=jax.lax.Precision.HIGHEST)
    return gx, gy


if __name__ == "__main__":
    key = jax.random.PRNGKey(0)
    # (2, 4, 16, 16) exercises the channel-sum / fan-out path; (2, 1, 16, 16)
    # exercises the C == 1 fast path (the module's default channel=1);
    # kernel_size=5 exercises the p=2 border-strip code.
    cases = [((2, 4, 16, 16), 3), ((2, 1, 16, 16), 3), ((2, 4, 16, 16), 5)]
    for shape, ksz in cases:
        x = jax.random.normal(key, shape, dtype=jnp.float32)

        gradx, grady = sobel_grad(x, kernel_size=ksz)
        gradx = jax.block_until_ready(gradx)
        grady = jax.block_until_ready(grady)

        ref_gx, ref_gy = reference_sobel_grad(x, kernel_size=ksz)
        tol = dict(rtol=1e-5, atol=1e-5) if ksz == 3 else dict(rtol=1e-4, atol=2e-4)
        np.testing.assert_allclose(np.asarray(gradx), np.asarray(ref_gx), **tol)
        np.testing.assert_allclose(np.asarray(grady), np.asarray(ref_gy), **tol)

    print("KERNEL_OK")
</pallas_src>

<mosaic_0001>
module attributes {stable_mosaic.version = 11 : i64} {
  func.func @_kernel_cn(%arg0: i32, %arg1: i32, %arg2: memref<1x4x16x16xf32, #tpu.memory_space<vmem>>, %arg3: memref<1x1x16x16xf32, #tpu.memory_space<vmem>>, %arg4: memref<1x1x16x16xf32, #tpu.memory_space<vmem>>, %arg5: memref<1x1x18x18xf32, #tpu.memory_space<vmem>>, %arg6: memref<1x1x16x16xf32, #tpu.memory_space<vmem>>, %arg7: memref<1x1x16x16xf32, #tpu.memory_space<vmem>>) attributes {dimension_semantics = [#tpu.dimension_semantics<parallel>, #tpu.dimension_semantics<arbitrary>], iteration_bounds = array<i64: 2, 4>, scalar_prefetch = 0 : i64, scratch_operands = 3 : i64, tpu.core_type = #tpu.core_type<tc>, window_params = [{transform_indices = @transform_0, window_bounds = array<i64: 1, 4, 16, 16>}, {transform_indices = @transform_1, window_bounds = array<i64: 1, 1, 16, 16>}, {transform_indices = @transform_2, window_bounds = array<i64: 1, 1, 16, 16>}]} {
    %c0_i32 = arith.constant 0 : i32
    %0 = arith.cmpi eq, %arg1, %c0_i32 : i32
    %1 = arith.extui %0 : i1 to i32
    %c0_i32_0 = arith.constant 0 : i32
    %2 = arith.cmpi ne, %1, %c0_i32_0 : i32
    scf.if %2 {
      %c0_16 = arith.constant 0 : index
      %c0_17 = arith.constant 0 : index
      %c0_18 = arith.constant 0 : index
      %c0_19 = arith.constant 0 : index
      %7 = vector.load %arg2[%c0_16, %c0_17, %c0_18, %c0_19] : memref<1x4x16x16xf32, #tpu.memory_space<vmem>>, vector<1x1x16x16xf32>
      %c0_20 = arith.constant 0 : index
      %c1 = arith.constant 1 : index
      %c0_21 = arith.constant 0 : index
      %c0_22 = arith.constant 0 : index
      %8 = vector.load %arg2[%c0_20, %c1, %c0_21, %c0_22] : memref<1x4x16x16xf32, #tpu.memory_space<vmem>>, vector<1x1x16x16xf32>
      %9 = arith.addf %7, %8 : vector<1x1x16x16xf32>
      %c0_23 = arith.constant 0 : index
      %c2 = arith.constant 2 : index
      %c0_24 = arith.constant 0 : index
      %c0_25 = arith.constant 0 : index
      %10 = vector.load %arg2[%c0_23, %c2, %c0_24, %c0_25] : memref<1x4x16x16xf32, #tpu.memory_space<vmem>>, vector<1x1x16x16xf32>
      %11 = arith.addf %9, %10 : vector<1x1x16x16xf32>
      %c0_26 = arith.constant 0 : index
      %c3 = arith.constant 3 : index
      %c0_27 = arith.constant 0 : index
      %c0_28 = arith.constant 0 : index
      %12 = vector.load %arg2[%c0_26, %c3, %c0_27, %c0_28] : memref<1x4x16x16xf32, #tpu.memory_space<vmem>>, vector<1x1x16x16xf32>
      %13 = arith.addf %11, %12 : vector<1x1x16x16xf32>
      %cst = arith.constant 0.000000e+00 : f32
      %14 = vector.broadcast %cst : f32 to vector<1x1x1x18xf32>
      %cst_29 = arith.constant 0.000000e+00 : f32
      %15 = vector.broadcast %cst_29 : f32 to vector<1x1x16x1xf32>
      %c0_30 = arith.constant 0 : index
      %c0_31 = arith.constant 0 : index
      %c0_32 = arith.constant 0 : index
      %c0_33 = arith.constant 0 : index
      %16 = vector.load %arg5[%c0_30, %c0_31, %c0_32, %c0_33] : memref<1x1x18x18xf32, #tpu.memory_space<vmem>>, vector<1x1x1x18xf32>
      tpu.vector_store %arg5[%c0_30, %c0_31, %c0_32, %c0_33], %14 {strides = array<i32>} : memref<1x1x18x18xf32, #tpu.memory_space<vmem>>, vector<1x1x1x18xf32>,
      %c0_34 = arith.constant 0 : index
      %c0_35 = arith.constant 0 : index
      %c17 = arith.constant 17 : index
      %c0_36 = arith.constant 0 : index
      %17 = vector.load %arg5[%c0_34, %c0_35, %c17, %c0_36] : memref<1x1x18x18xf32, #tpu.memory_space<vmem>>, vector<1x1x1x18xf32>
      tpu.vector_store %arg5[%c0_34, %c0_35, %c17, %c0_36], %14 {strides = array<i32>} : memref<1x1x18x18xf32, #tpu.memory_space<vmem>>, vector<1x1x1x18xf32>,
      %c0_37 = arith.constant 0 : index
      %c0_38 = arith.constant 0 : index
      %c1_39 = arith.constant 1 : index
      %c0_40 = arith.constant 0 : index
      %18 = vector.load %arg5[%c0_37, %c0_38, %c1_39, %c0_40] : memref<1x1x18x18xf32, #tpu.memory_space<vmem>>, vector<1x1x16x1xf32>
      tpu.vector_store %arg5[%c0_37, %c0_38, %c1_39, %c0_40], %15 {strides = array<i32>} : memref<1x1x18x18xf32, #tpu.memory_space<vmem>>, vector<1x1x16x1xf32>,
      %c0_41 = arith.constant 0 : index
      %c0_42 = arith.constant 0 : index
      %c1_43 = arith.constant 1 : index
      %c17_44 = arith.constant 17 : index
      %19 = vector.load %arg5[%c0_41, %c0_42, %c1_43, %c17_44] : memref<1x1x18x18xf32, #tpu.memory_space<vmem>>, vector<1x1x16x1xf32>
      tpu.vector_store %arg5[%c0_41, %c0_42, %c1_43, %c17_44], %15 {strides = array<i32>} : memref<1x1x18x18xf32, #tpu.memory_space<vmem>>, vector<1x1x16x1xf32>,
      %c0_45 = arith.constant 0 : index
      %c0_46 = arith.constant 0 : index
      %c1_47 = arith.constant 1 : index
      %c1_48 = arith.constant 1 : index
      %20 = vector.load %arg5[%c0_45, %c0_46, %c1_47, %c1_48] : memref<1x1x18x18xf32, #tpu.memory_space<vmem>>, vector<1x1x16x16xf32>
      tpu.vector_store %arg5[%c0_45, %c0_46, %c1_47, %c1_48], %13 {strides = array<i32>} : memref<1x1x18x18xf32, #tpu.memory_space<vmem>>, vector<1x1x16x16xf32>,
      %cst_49 = arith.constant 0.000000e+00 : f32
      %21 = vector.broadcast %cst_49 : f32 to vector<1x1x16x16xf32>
      %cst_50 = arith.constant 0.000000e+00 : f32
      %22 = vector.broadcast %cst_50 : f32 to vector<1x1x16x16xf32>
      %c0_51 = arith.constant 0 : index
      %c0_52 = arith.constant 0 : index
      %c0_53 = arith.constant 0 : index
      %c1_54 = arith.constant 1 : index
      %23 = vector.load %arg5[%c0_51, %c0_52, %c0_53, %c1_54] : memref<1x1x18x18xf32, #tpu.memory_space<vmem>>, vector<1x1x16x16xf32>
      %cst_55 = arith.constant 2.000000e+00 : f32
      %24 = vector.broadcast %cst_55 : f32 to vector<1x1x16x16xf32>
      %25 = arith.mulf %24, %23 : vector<1x1x16x16xf32>
      %26 = arith.addf %21, %25 : vector<1x1x16x16xf32>
      %c0_56 = arith.constant 0 : index
      %c0_57 = arith.constant 0 : index
      %c0_58 = arith.constant 0 : index
      %c2_59 = arith.constant 2 : index
      %27 = vector.load %arg5[%c0_56, %c0_57, %c0_58, %c2_59] : memref<1x1x18x18xf32, #tpu.memory_space<vmem>>, vector<1x1x16x16xf32>
      %cst_60 = arith.constant -2.000000e+00 : f32
      %28 = vector.broadcast %cst_60 : f32 to vector<1x1x16x16xf32>
      %29 = arith.mulf %28, %27 : vector<1x1x16x16xf32>
      %30 = arith.addf %26, %29 : vector<1x1x16x16xf32>
      %c0_61 = arith.constant 0 : index
      %c0_62 = arith.constant 0 : index
      %c1_63 = arith.constant 1 : index
      %c0_64 = arith.constant 0 : index
      %31 = vector.load %arg5[%c0_61, %c0_62, %c1_63, %c0_64] : memref<1x1x18x18xf32, #tpu.memory_space<vmem>>, vector<1x1x16x16xf32>
      %cst_65 = arith.constant 2.000000e+00 : f32
      %32 = vector.broadcast %cst_65 : f32 to vector<1x1x16x16xf32>
      %33 = arith.mulf %32, %31 : vector<1x1x16x16xf32>
      %34 = arith.addf %22, %33 : vector<1x1x16x16xf32>
      %c0_66 = arith.constant 0 : index
      %c0_67 = arith.constant 0 : index
      %c1_68 = arith.constant 1 : index
      %c1_69 = arith.constant 1 : index
      %35 = vector.load %arg5[%c0_66, %c0_67, %c1_68, %c1_69] : memref<1x1x18x18xf32, #tpu.memory_space<vmem>>, vector<1x1x16x16xf32>
      %cst_70 = arith.constant 1.000000e+00 : f32
      %36 = vector.broadcast %cst_70 : f32 to vector<1x1x16x16xf32>
      %37 = arith.mulf %36, %35 : vector<1x1x16x16xf32>
      %38 = arith.addf %30, %37 : vector<1x1x16x16xf32>
      %cst_71 = arith.constant 1.000000e+00 : f32
      %39 = vector.broadcast %cst_71 : f32 to vector<1x1x16x16xf32>
      %40 = arith.mulf %39, %35 : vector<1x1x16x16xf32>
      %41 = arith.addf %34, %40 : vector<1x1x16x16xf32>
      %c0_72 = arith.constant 0 : index
      %c0_73 = arith.constant 0 : index
      %c1_74 = arith.constant 1 : index
      %c2_75 = arith.constant 2 : index
      %42 = vector.load %arg5[%c0_72, %c0_73, %c1_74, %c2_75] : memref<1x1x18x18xf32, #tpu.memory_space<vmem>>, vector<1x1x16x16xf32>
      %cst_76 = arith.constant -1.000000e+00 : f32
      %43 = vector.broadcast %cst_76 : f32 to vector<1x1x16x16xf32>
      %44 = arith.mulf %43, %42 : vector<1x1x16x16xf32>
      %45 = arith.addf %38, %44 : vector<1x1x16x16xf32>
      %cst_77 = arith.constant 1.000000e+00 : f32
      %46 = vector.broadcast %cst_77 : f32 to vector<1x1x16x16xf32>
      %47 = arith.mulf %46, %42 : vector<1x1x16x16xf32>
      %48 = arith.addf %41, %47 : vector<1x1x16x16xf32>
      %c0_78 = arith.constant 0 : index
      %c0_79 = arith.constant 0 : index
      %c2_80 = arith.constant 2 : index
      %c0_81 = arith.constant 0 : index
      %49 = vector.load %arg5[%c0_78, %c0_79, %c2_80, %c0_81] : memref<1x1x18x18xf32, #tpu.memory_space<vmem>>, vector<1x1x16x16xf32>
      %cst_82 = arith.constant -2.000000e+00 : f32
      %50 = vector.broadcast %cst_82 : f32 to vector<1x1x16x16xf32>
      %51 = arith.mulf %50, %49 : vector<1x1x16x16xf32>
      %52 = arith.addf %48, %51 : vector<1x1x16x16xf32>
      %c0_83 = arith.constant 0 : index
      %c0_84 = arith.constant 0 : index
      %c2_85 = arith.constant 2 : index
      %c1_86 = arith.constant 1 : index
      %53 = vector.load %arg5[%c0_83, %c0_84, %c2_85, %c1_86] : memref<1x1x18x18xf32, #tpu.memory_space<vmem>>, vector<1x1x16x16xf32>
      %cst_87 = arith.constant 1.000000e+00 : f32
      %54 = vector.broadcast %cst_87 : f32 to vector<1x1x16x16xf32>
      %55 = arith.mulf %54, %53 : vector<1x1x16x16xf32>
      %56 = arith.addf %45, %55 : vector<1x1x16x16xf32>
      %cst_88 = arith.constant -1.000000e+00 : f32
      %57 = vector.broadcast %cst_88 : f32 to vector<1x1x16x16xf32>
      %58 = arith.mulf %57, %53 : vector<1x1x16x16xf32>
      %59 = arith.addf %52, %58 : vector<1x1x16x16xf32>
      %c0_89 = arith.constant 0 : index
      %c0_90 = arith.constant 0 : index
      %c2_91 = arith.constant 2 : index
      %c2_92 = arith.constant 2 : index
      %60 = vector.load %arg5[%c0_89, %c0_90, %c2_91, %c2_92] : memref<1x1x18x18xf32, #tpu.memory_space<vmem>>, vector<1x1x16x16xf32>
      %cst_93 = arith.constant -1.000000e+00 : f32
      %61 = vector.broadcast %cst_93 : f32 to vector<1x1x16x16xf32>
      %62 = arith.mulf %61, %60 : vector<1x1x16x16xf32>
      %63 = arith.addf %56, %62 : vector<1x1x16x16xf32>
      %cst_94 = arith.constant -1.000000e+00 : f32
      %64 = vector.broadcast %cst_94 : f32 to vector<1x1x16x16xf32>
      %65 = arith.mulf %64, %60 : vector<1x1x16x16xf32>
      %66 = arith.addf %59, %65 : vector<1x1x16x16xf32>
      %c0_95 = arith.constant 0 : index
      %c0_96 = arith.constant 0 : index
      %c0_97 = arith.constant 0 : index
      %c0_98 = arith.constant 0 : index
      %67 = vector.load %arg6[%c0_95, %c0_96, %c0_97, %c0_98] : memref<1x1x16x16xf32, #tpu.memory_space<vmem>>, vector<1x1x16x16xf32>
      tpu.vector_store %arg6[%c0_95, %c0_96, %c0_97, %c0_98], %63 {strides = array<i32>} : memref<1x1x16x16xf32, #tpu.memory_space<vmem>>, vector<1x1x16x16xf32>,
      %c0_99 = arith.constant 0 : index
      %c0_100 = arith.constant 0 : index
      %c0_101 = arith.constant 0 : index
      %c0_102 = arith.constant 0 : index
      %68 = vector.load %arg7[%c0_99, %c0_100, %c0_101, %c0_102] : memref<1x1x16x16xf32, #tpu.memory_space<vmem>>, vector<1x1x16x16xf32>
      tpu.vector_store %arg7[%c0_99, %c0_100, %c0_101, %c0_102], %66 {strides = array<i32>} : memref<1x1x16x16xf32, #tpu.memory_space<vmem>>, vector<1x1x16x16xf32>,
    } else {
    }
    %c0 = arith.constant 0 : index
    %c0_1 = arith.constant 0 : index
    %c0_2 = arith.constant 0 : index
    %c0_3 = arith.constant 0 : index
    %3 = vector.load %arg6[%c0, %c0_1, %c0_2, %c0_3] : memref<1x1x16x16xf32, #tpu.memory_space<vmem>>, vector<1x1x16x16xf32>
    %c0_4 = arith.constant 0 : index
    %c0_5 = arith.constant 0 : index
    %c0_6 = arith.constant 0 : index
    %c0_7 = arith.constant 0 : index
    %4 = vector.load %arg3[%c0_4, %c0_5, %c0_6, %c0_7] : memref<1x1x16x16xf32, #tpu.memory_space<vmem>>, vector<1x1x16x16xf32>
    tpu.vector_store %arg3[%c0_4, %c0_5, %c0_6, %c0_7], %3 {strides = array<i32>} : memref<1x1x16x16xf32, #tpu.memory_space<vmem>>, vector<1x1x16x16xf32>,
    %c0_8 = arith.constant 0 : index
    %c0_9 = arith.constant 0 : index
    %c0_10 = arith.constant 0 : index
    %c0_11 = arith.constant 0 : index
    %5 = vector.load %arg7[%c0_8, %c0_9, %c0_10, %c0_11] : memref<1x1x16x16xf32, #tpu.memory_space<vmem>>, vector<1x1x16x16xf32>
    %c0_12 = arith.constant 0 : index
    %c0_13 = arith.constant 0 : index
    %c0_14 = arith.constant 0 : index
    %c0_15 = arith.constant 0 : index
    %6 = vector.load %arg4[%c0_12, %c0_13, %c0_14, %c0_15] : memref<1x1x16x16xf32, #tpu.memory_space<vmem>>, vector<1x1x16x16xf32>
    tpu.vector_store %arg4[%c0_12, %c0_13, %c0_14, %c0_15], %5 {strides = array<i32>} : memref<1x1x16x16xf32, #tpu.memory_space<vmem>>, vector<1x1x16x16xf32>,
    return
  }
  func.func @transform_0(%arg0: i32, %arg1: i32) -> (i32, i32, i32, i32) {
    %c0_i32 = arith.constant 0 : i32
    %c0_i32_0 = arith.constant 0 : i32
    %c0_i32_1 = arith.constant 0 : i32
    %c0_i32_2 = arith.constant 0 : i32
    return %arg0, %c0_i32, %c0_i32_0, %c0_i32_1 : i32, i32, i32, i32
  }
  func.func @transform_1(%arg0: i32, %arg1: i32) -> (i32, i32, i32, i32) {
    %c0_i32 = arith.constant 0 : i32
    %c0_i32_0 = arith.constant 0 : i32
    %c0_i32_1 = arith.constant 0 : i32
    return %arg0, %arg1, %c0_i32, %c0_i32_0 : i32, i32, i32, i32
  }
  func.func @transform_2(%arg0: i32, %arg1: i32) -> (i32, i32, i32, i32) {
    %c0_i32 = arith.constant 0 : i32
    %c0_i32_0 = arith.constant 0 : i32
    %c0_i32_1 = arith.constant 0 : i32
    return %arg0, %arg1, %c0_i32, %c0_i32_0 : i32, i32, i32, i32
  }
}

</mosaic_0001>

<llo_original>
// kernel: tpu_custom_call.1
$region0: #{tpu_custom_call.1}
  #allocation0 [shape = 'u32[]', space=smem, size = 0x4, offset = 0x4, fixed_abs, tag = 'smem constant byte address 0x4 - core index']
  #allocation1 [shape = 'u32[144,128]{1,0:T(1,128)}', space=vmem, size = 0x12000, scoped, tag = 'internal scratch']
  #allocation2 [shape = 'f32[1,1,18,18]{3,2,1,0:T(8,128)}', space=vmem, size = 0x3000, scoped, tag = 'scratch operand']
  #allocation3 [shape = 'f32[1,1,16,16]{3,2,1,0:T(8,128)}', space=vmem, size = 0x2000, scoped, tag = 'scratch operand']
  #allocation4 [shape = 'f32[1,1,16,16]{3,2,1,0:T(8,128)}', space=vmem, size = 0x2000, scoped, tag = 'scratch operand']
  %s0 = inlined_call_operand.hbm [shape: f32[2,4,16,16], index: 0, kind: input, shape index: {}]
  %s1 = inlined_call_operand.hbm [shape: f32[2,4,16,16], index: 1, kind: output, shape index: {0}]
  %s2 = inlined_call_operand.hbm [shape: f32[2,4,16,16], index: 2, kind: output, shape index: {1}]
  %3 = xla_tuple %s1, %s2
  %s4 = sld [smem:[#allocation0]]
  $region53: #{tpu_custom_call.1} parent=0
    _
  %s6 = ssub.s32 1, %s4
  %s7 = scalar_select 0, %s6, %s4
  $region1: #{tpu_custom_call.1} parent=0
    #allocation5 [shape = 'u8[65536]{0}', space=vmem, size = 0x10000, scoped, tag = 'input window, operand 0']
    #allocation6 [shape = 's32[2]{0}', space=sflag, size = 0x8, scoped, tag = 'scoped memory for tpu_custom_call.1']
    #allocation7 [shape = 's32[2]{0}', space=sflag, size = 0x8, scoped, tag = 'scoped memory for tpu_custom_call.1']
    #allocation8 [shape = 'u8[16384]{0}', space=vmem, size = 0x4000, scoped, tag = 'output window, operand 0']
    #allocation9 [shape = 'u8[16384]{0}', space=vmem, size = 0x4000, scoped, tag = 'output window, operand 1']
    #allocation10 [shape = 's32[2]{0}', space=sflag, size = 0x8, scoped, tag = 'scoped memory for tpu_custom_call.1']
    %8 = vsyncpa [#allocation6], 0
    %s9 = scalar_lea.sflag [#allocation6], 1
    %10 = vsyncpa %s9, 0
    %11 = vsyncpa [#allocation7], 0
    %s12 = scalar_lea.sflag [#allocation7], 1
    %13 = vsyncpa %s12, 0
    %14 = vsyncpa [#allocation10], 0
    %s15 = scalar_lea.sflag [#allocation10], 1
    %16 = vsyncpa %s15, 0
    loop: start=0, step=1, limit=10
    $region2: #{tpu_custom_call.1} parent=1 // loop_pre_header
      _
    $region3: #{tpu_custom_call.1} parent=1 // loop_header
      %s18 = sphi 0, %s22
      %p19 = scmp.ge.s32.totalorder %s18, 10
      %s25 = sphi 0, %s37
      %s26 = sphi 0, %s33
      %s27 = sphi 0, %s25
      %s28 = sphi 0, %s26
      %s29 = sphi 0, %s27
      %s30 = sphi 0, %s28
      %s40 = sphi 0, %s42
      %s43 = sphi 0, %s40
      %s44 = sphi 0, %s43
      %s60 = sphi 0, %s44
      %s68 = sphi 0, %s70
      %s71 = sphi 0, %s68
      %s72 = sphi 0, %s71
      %s88 = sphi 0, %s72
      %s96 = sphi 0, %s98
      %s99 = sphi 0, %s96
      %s100 = sphi 0, %s99
      %s116 = sphi 0, %s100
    $region4: #{tpu_custom_call.1} parent=1 // loop_header_branch
      %21 = sbr.rel (%p19) target = $region8
    $region5: #{tpu_custom_call.1} parent=1 // loop_body
      %s23 = ssub.s32 %s18, 1
      %s24 = ssub.s32 %s18, 2
      %s31 = sadd.s32 1, %s26
      %p32 = scmp.ge.s32.totalorder %s31, 4
      %s33 = scalar_select %p32, 0, %s31
      %s34 = sadd.s32 1, %s25
      %s35 = scalar_select %p32, %s34, %s25
      %p36 = scmp.ge.s32.totalorder %s35, 2
      %s37 = scalar_select %p36, 0, %s35
      %s38 = ssub.s32 %s25, %s37
      %p39 = scmp.eq.s32.totalorder %s38, 0
      %s41 = sadd.s32 %s40, 1
      %s42 = scalar_select %p39, %s40, %s41
      %p45 = pneg %p39
      %p46 = scmp.eq.s32.totalorder %s18, 7
      %p47 = por %p45, %p46
      %p48 = scmp.ne.s32.totalorder %s40, %s43
      %p49 = scmp.eq.s32.totalorder %s18, 0
      %p50 = por %p48, %p49
      %p51 = scmp.ne.s32.totalorder %s40, %s43
      %p52 = scmp.eq.s32.totalorder %s23, 7
      %p53 = por %p51, %p52
      %p54 = scmp.ne.s32.totalorder %s43, %s44
      %p55 = scmp.eq.s32.totalorder %s23, 0
      %p56 = por %p54, %p55
      %p57 = scmp.ne.s32.totalorder %s43, %s44
      %p58 = scmp.eq.s32.totalorder %s24, 7
      %p59 = por %p57, %p58
      %p61 = scmp.ne.s32.totalorder %s44, %s60
      %p62 = scmp.eq.s32.totalorder %s24, 0
      %p63 = por %p61, %p62
      %s64 = ssub.s32 %s25, %s37
      %s65 = ssub.s32 %s26, %s33
      %s66 = sor.u32 %s64, %s65
      %p67 = scmp.eq.s32.totalorder %s66, 0
      %s69 = sadd.s32 %s68, 1
      %s70 = scalar_select %p67, %s68, %s69
      %p73 = pneg %p67
      %p74 = scmp.eq.s32.totalorder %s18, 7
      %p75 = por %p73, %p74
      %p76 = scmp.ne.s32.totalorder %s68, %s71
      %p77 = scmp.eq.s32.totalorder %s18, 0
      %p78 = por %p76, %p77
      %p79 = scmp.ne.s32.totalorder %s68, %s71
      %p80 = scmp.eq.s32.totalorder %s23, 7
      %p81 = por %p79, %p80
      %p82 = scmp.ne.s32.totalorder %s71, %s72
      %p83 = scmp.eq.s32.totalorder %s23, 0
      %p84 = por %p82, %p83
      %p85 = scmp.ne.s32.totalorder %s71, %s72
      %p86 = scmp.eq.s32.totalorder %s24, 7
      %p87 = por %p85, %p86
      %p89 = scmp.ne.s32.totalorder %s72, %s88
      %p90 = scmp.eq.s32.totalorder %s24, 0
      %p91 = por %p89, %p90
      %s92 = ssub.s32 %s25, %s37
      %s93 = ssub.s32 %s26, %s33
      %s94 = sor.u32 %s92, %s93
      %p95 = scmp.eq.s32.totalorder %s94, 0
      %s97 = sadd.s32 %s96, 1
      %s98 = scalar_select %p95, %s96, %s97
      %p101 = pneg %p95
      %p102 = scmp.eq.s32.totalorder %s18, 7
      %p103 = por %p101, %p102
      %p104 = scmp.ne.s32.totalorder %s96, %s99
      %p105 = scmp.eq.s32.totalorder %s18, 0
      %p106 = por %p104, %p105
      %p107 = scmp.ne.s32.totalorder %s96, %s99
      %p108 = scmp.eq.s32.totalorder %s23, 7
      %p109 = por %p107, %p108
      %p110 = scmp.ne.s32.totalorder %s99, %s100
      %p111 = scmp.eq.s32.totalorder %s23, 0
      %p112 = por %p110, %p111
      %p113 = scmp.ne.s32.totalorder %s99, %s100
      %p114 = scmp.eq.s32.totalorder %s24, 7
      %p115 = por %p113, %p114
      %p117 = scmp.ne.s32.totalorder %s100, %s116
      %p118 = scmp.eq.s32.totalorder %s24, 0
      %p119 = por %p117, %p118
      %p120 = scmp.le.s32.totalorder 1, %s18
      %p121 = scmp.lt.s32.totalorder %s18, 9
      %p122 = pnand %p120, %p121
      %p123 = pneg %p122
      // Predicated region
      $region9: #{tpu_custom_call.1} parent=5 // pred_check
        _
      $region10: #{tpu_custom_call.1} parent=5 // pred_check_branch
        %125 = sbr.rel (%p122) target = $region12
      $region11: #{tpu_custom_call.1} parent=5 // pred_region
        %s126 = ssub.s32 %s18, 1
      $region12: #{tpu_custom_call.1} parent=5 // pred_fallthru
        _
      %p127 = scmp.lt.s32.totalorder %s18, 8
      // Predicated region
      $region13: #{tpu_custom_call.1} parent=5 // pred_check
        %p128 = pneg %p127
      $region14: #{tpu_custom_call.1} parent=5 // pred_check_branch
        %130 = sbr.rel (%p128) target = $region16
      $region15: #{tpu_custom_call.1} parent=5 // pred_region
        // Predicated region
        $region17: #{tpu_custom_call.1} parent=15 // pred_check
          %p131 = pneg %p50
        $region18: #{tpu_custom_call.1} parent=15 // pred_check_branch
          %133 = sbr.rel (%p131) target = $region20
        $region19: #{tpu_custom_call.1} parent=15 // pred_region
          %s134 = sand.u32 %s40, 1
          %s135 = scalar_lea.sflag [#allocation6], %s134
          %s136 = sand.u32 %s40, 1
          %s137 = smul.addr %s136, 64
          %s138 = scalar_lea.vmem [#allocation5], %s137
          %s140 = ssub.s32 1024, 1024
          %141 = vsyncadd %s135, %s140
          %s142 = smul.addr %s25, 8
          %s143 = smul.addr %s142, 128
          %s144 = scalar_lea.hbm %s0, %s143
          %s145 = sshll.u32 %s138, 4
          %s146 = int_to_ptr.vmem [resolvable:$true] %s145
          %151 = dma.hbm_to_vmem [thread:$0]  %s144, 1024, %s146, %s135, 128, 128, 8
        $region20: #{tpu_custom_call.1} parent=15 // pred_fallthru
          _
      $region16: #{tpu_custom_call.1} parent=5 // pred_fallthru
        _
      %p152 = scmp.le.s32.totalorder 1, %s18
      %p153 = scmp.lt.s32.totalorder %s18, 9
      %p154 = pnand %p152, %p153
      %p155 = pneg %p154
      // Predicated region
      $region21: #{tpu_custom_call.1} parent=5 // pred_check
        _
      $region22: #{tpu_custom_call.1} parent=5 // pred_check_branch
        %157 = sbr.rel (%p154) target = $region24
      $region23: #{tpu_custom_call.1} parent=5 // pred_region
        %s158 = ssub.s32 %s18, 1
        %s159 = sand.u32 %s43, 1
        %s160 = scalar_lea.sflag [#allocation6], %s159
        %s161 = sand.u32 %s43, 1
        %s162 = smul.addr %s161, 64
        %s163 = scalar_lea.vmem [#allocation5], %s162
        // Predicated region
        $region25: #{tpu_custom_call.1} parent=23 // pred_check
          %p164 = pneg %p56
        $region26: #{tpu_custom_call.1} parent=23 // pred_check_branch
          %166 = sbr.rel (%p164) target = $region28
        $region27: #{tpu_custom_call.1} parent=23 // pred_region
          %167 = dma.done %s160, 1024
        $region28: #{tpu_custom_call.1} parent=23 // pred_fallthru
          _
        %s168 = sand.u32 %s43, 1
        %s169 = scalar_lea.sflag [#allocation6], %s168
        %s170 = sand.u32 %s43, 1
        %s171 = smul.addr %s170, 64
        %s172 = scalar_lea.vmem [#allocation5], %s171
        %p173 = pneg %p56
        %p174 = pneg %p53
        %p175 = pneg %p84
        %p176 = pneg %p81
        %s177 = sand.u32 %s71, 1
        %s178 = scalar_lea.sflag [#allocation7], %s177
        %s179 = sand.u32 %s71, 1
        %s180 = smul.addr %s179, 16
        %s181 = scalar_lea.vmem [#allocation8], %s180
        %p182 = pneg %p112
        %p183 = pneg %p109
        %s184 = sand.u32 %s99, 1
        %s185 = scalar_lea.sflag [#allocation10], %s184
        %s186 = sand.u32 %s99, 1
        %s187 = smul.addr %s186, 16
        %s188 = scalar_lea.vmem [#allocation9], %s187
        %p189 = scmp.eq.s32.totalorder %s28, 0
        // Predicated region
        $region29: #{tpu_custom_call.1} parent=23 // pred_check
          %p190 = pneg %p189
        $region30: #{tpu_custom_call.1} parent=23 // pred_check_branch
          %192 = sbr.rel (%p190) target = $region32
        $region31: #{tpu_custom_call.1} parent=23 // pred_region
          %v193 = vld [vmem:[%s163] sm:$0xff]
          %v194 = vld [vmem:[%s163 + $0x8] sm:$0xff]
          %s195 = scalar_lea.vmem %s163, 16 [#allocation5]
          %v196 = vld [vmem:[%s195] sm:$0xff]
          %v197 = vld [vmem:[%s195 + $0x8] sm:$0xff]
          %v198 = vadd.f32 %v193, %v196
          %v199 = vadd.f32 %v194, %v197
          %s200 = scalar_lea.vmem %s163, 32 [#allocation5]
          %v201 = vld [vmem:[%s200] sm:$0xff]
          %v202 = vld [vmem:[%s200 + $0x8] sm:$0xff]
          %v203 = vadd.f32 %v198, %v201
          %v204 = vadd.f32 %v199, %v202
          %s205 = scalar_lea.vmem %s163, 48 [#allocation5]
          %v206 = vld [vmem:[%s205] sm:$0xff]
          %v207 = vld [vmem:[%s205 + $0x8] sm:$0xff]
          %v208 = vadd.f32 %v203, %v206
          %v209 = vadd.f32 %v204, %v207
          %vm210 = vcmask 139264
          %211 = vst.msk [vmem:[#allocation2] sm:$0x1] %vm210, 0.0
          %212 = vst.msk [vmem:[#allocation2 + $0x11] sm:$0x1] %vm210, 0.0
          %vm213 = vcmask 7168
          %214 = vst.msk [vmem:[#allocation2 + $0x1] sm:$0xff] %vm213, 0.0
          %215 = vst.msk [vmem:[#allocation2 + $0x9] sm:$0xff] %vm213, 0.0
          %vm216 = vcmask 146568
          %217 = vst.msk [vmem:[#allocation2 + $0x1] sm:$0xff] %vm216, 0.0
          %218 = vst.msk [vmem:[#allocation2 + $0x9] sm:$0xff] %vm216, 0.0
          %221 = vrot.lane.b32.xlu0 %v208, 1
          %v222 = vpop.permute.xlu0 %221
          %223 = vrot.lane.b32.xlu0 %v209, 1
          %v224 = vpop.permute.xlu0 %223
          %vm227 = vcmask 138248
          %228 = vst.msk [vmem:[#allocation2 + $0x1] sm:$0xff] %vm227, %v222
          %229 = vst.msk [vmem:[#allocation2 + $0x9] sm:$0xff] %vm227, %v224
          %v230 = vld [vmem:[#allocation2] sm:$0xff]
          %v231 = vld [vmem:[#allocation2 + $0x8] sm:$0xff]
          %v232 = vmul.f32 %v230, 2.0
          %v233 = vmul.f32 %v231, 2.0
          %v234 = vadd.f32 %v232, 0.0
          %v235 = vadd.f32 %v233, 0.0
          %v236 = vmul.f32 %v230, -2.0
          %v237 = vmul.f32 %v231, -2.0
          %240 = vrot.lane.b32.xlu0 %v236, 127
          %v241 = vpop.permute.xlu0 %240
          %242 = vrot.lane.b32.xlu0 %v237, 127
          %v243 = vpop.permute.xlu0 %242
          %v246 = vadd.f32 %v234, %v241
          %v247 = vadd.f32 %v235, %v243
          %v248 = vld [vmem:[#allocation2 + $0x1] sm:$0xff]
          %v249 = vld [vmem:[#allocation2 + $0x9] sm:$0xff]
          %v250 = vmul.f32 %v248, 2.0
          %v251 = vmul.f32 %v249, 2.0
          %v252 = vadd.f32 %v250, 0.0
          %v253 = vadd.f32 %v251, 0.0
          %v254 = vadd.f32 %v246, %v248
          %v255 = vadd.f32 %v247, %v249
          %258 = vrot.lane.b32.xlu0 %v248, 127
          %v259 = vpop.permute.xlu0 %258
          %260 = vrot.lane.b32.xlu0 %v249, 127
          %v261 = vpop.permute.xlu0 %260
          %v264 = vadd.f32 %v252, %v259
          %v265 = vadd.f32 %v253, %v261
          %v266 = vmul.f32 %v248, -1.0
          %v267 = vmul.f32 %v249, -1.0
          %270 = vrot.lane.b32.xlu0 %v266, 127
          %v271 = vpop.permute.xlu0 %270
          %272 = vrot.lane.b32.xlu0 %v267, 127
          %v273 = vpop.permute.xlu0 %272
          %v276 = vadd.f32 %v254, %v271
          %v277 = vadd.f32 %v255, %v273
          %278 = vrot.lane.b32.xlu0 %v248, 126
          %v279 = vpop.permute.xlu0 %278
          %280 = vrot.lane.b32.xlu0 %v249, 126
          %v281 = vpop.permute.xlu0 %280
          %v284 = vadd.f32 %v264, %v279
          %v285 = vadd.f32 %v265, %v281
          %v286 = vld [vmem:[#allocation2 + $0x2] sm:$0xff]
          %v287 = vld [vmem:[#allocation2 + $0xa] sm:$0xff]
          %v288 = vmul.f32 %v286, -2.0
          %v289 = vmul.f32 %v287, -2.0
          %v290 = vadd.f32 %v284, %v288
          %v291 = vadd.f32 %v285, %v289
          %v292 = vadd.f32 %v276, %v286
          %v293 = vadd.f32 %v277, %v287
          %v294 = vmul.f32 %v286, -1.0
          %v295 = vmul.f32 %v287, -1.0
          %298 = vrot.lane.b32.xlu0 %v294, 127
          %v299 = vpop.permute.xlu0 %298
          %300 = vrot.lane.b32.xlu0 %v295, 127
          %v301 = vpop.permute.xlu0 %300
          %v304 = vadd.f32 %v290, %v299
          %v305 = vadd.f32 %v291, %v301
          %v306 = vadd.f32 %v292, %v299
          %v307 = vadd.f32 %v293, %v301
          %308 = vrot.lane.b32.xlu0 %v294, 126
          %v309 = vpop.permute.xlu0 %308
          %310 = vrot.lane.b32.xlu0 %v295, 126
          %v311 = vpop.permute.xlu0 %310
          %v314 = vadd.f32 %v304, %v309
          %v315 = vadd.f32 %v305, %v311
          %318 = vrot.lane.b32.xlu0 %v306, 127
          %v319 = vpop.permute.xlu0 %318
          %320 = vrot.lane.b32.xlu0 %v307, 127
          %v321 = vpop.permute.xlu0 %320
          %vm324 = vcmask 130048
          %325 = vst.msk [vmem:[#allocation3] sm:$0xff] %vm324, %v319
          %326 = vst.msk [vmem:[#allocation3 + $0x8] sm:$0xff] %vm324, %v321
          %327 = vst.msk [vmem:[#allocation4] sm:$0xff] %vm324, %v314
          %328 = vst.msk [vmem:[#allocation4 + $0x8] sm:$0xff] %vm324, %v315
        $region32: #{tpu_custom_call.1} parent=23 // pred_fallthru
          _
        %v329 = vld [vmem:[#allocation3] sm:$0xff]
        %v330 = vld [vmem:[#allocation3 + $0x8] sm:$0xff]
        %vm331 = vcmask 130048
        %332 = vst.msk [vmem:[%s181] sm:$0xff] %vm331, %v329
        %333 = vst.msk [vmem:[%s181 + $0x8] sm:$0xff] %vm331, %v330
        %v334 = vld [vmem:[#allocation4] sm:$0xff]
        %v335 = vld [vmem:[#allocation4 + $0x8] sm:$0xff]
        %336 = vst.msk [vmem:[%s188] sm:$0xff] %vm331, %v334
        %337 = vst.msk [vmem:[%s188 + $0x8] sm:$0xff] %vm331, %v335
        %s338 = sand.u32 %s71, 1
        %s339 = scalar_lea.sflag [#allocation7], %s338
        %s340 = sand.u32 %s71, 1
        %s341 = smul.addr %s340, 16
        %s342 = scalar_lea.vmem [#allocation8], %s341
        %s343 = sand.u32 %s99, 1
        %s344 = scalar_lea.sflag [#allocation10], %s343
        %s345 = sand.u32 %s99, 1
        %s346 = smul.addr %s345, 16
        %s347 = scalar_lea.vmem [#allocation9], %s346
        // Predicated region
        $region33: #{tpu_custom_call.1} parent=23 // pred_check
          %p348 = pneg %p81
        $region34: #{tpu_custom_call.1} parent=23 // pred_check_branch
          %350 = sbr.rel (%p348) target = $region36
        $region35: #{tpu_custom_call.1} parent=23 // pred_region
          %s352 = ssub.s32 256, 256
          %353 = vsyncadd %s339, %s352
          %s354 = smul.addr %s28, 2
          %s355 = smul.addr %s27, 8
          %s356 = sadd.s32 %s354, %s355
          %s357 = smul.addr %s356, 128
          %s358 = scalar_lea.hbm %s1, %s357
          %s359 = sshll.u32 %s342, 4
          %s360 = int_to_ptr.vmem [resolvable:$true] %s359
          %365 = dma.vmem_to_hbm [thread:$0]  %s360, 256, %s358, %s339, 128, 128, 8
        $region36: #{tpu_custom_call.1} parent=23 // pred_fallthru
          _
        // Predicated region
        $region37: #{tpu_custom_call.1} parent=23 // pred_check
          %p366 = pneg %p109
        $region38: #{tpu_custom_call.1} parent=23 // pred_check_branch
          %368 = sbr.rel (%p366) target = $region40
        $region39: #{tpu_custom_call.1} parent=23 // pred_region
          %s370 = ssub.s32 256, 256
          %371 = vsyncadd %s344, %s370
          %s372 = smul.addr %s28, 2
          %s373 = smul.addr %s27, 8
          %s374 = sadd.s32 %s372, %s373
          %s375 = smul.addr %s374, 128
          %s376 = scalar_lea.hbm %s2, %s375
          %s377 = sshll.u32 %s347, 4
          %s378 = int_to_ptr.vmem [resolvable:$true] %s377
          %383 = dma.vmem_to_hbm [thread:$0]  %s378, 256, %s376, %s344, 128, 128, 8
        $region40: #{tpu_custom_call.1} parent=23 // pred_fallthru
          _
      $region24: #{tpu_custom_call.1} parent=5 // pred_fallthru
        _
      %p384 = scmp.le.s32.totalorder 2, %s18
      // Predicated region
      $region41: #{tpu_custom_call.1} parent=5 // pred_check
        %p385 = pneg %p384
      $region42: #{tpu_custom_call.1} parent=5 // pred_check_branch
        %387 = sbr.rel (%p385) target = $region44
      $region43: #{tpu_custom_call.1} parent=5 // pred_region
        %s388 = ssub.s32 %s18, 2
        // Predicated region
        $region45: #{tpu_custom_call.1} parent=43 // pred_check
          %p389 = pneg %p87
        $region46: #{tpu_custom_call.1} parent=43 // pred_check_branch
          %391 = sbr.rel (%p389) target = $region48
        $region47: #{tpu_custom_call.1} parent=43 // pred_region
          %s392 = sand.u32 %s72, 1
          %s393 = scalar_lea.sflag [#allocation7], %s392
          %s394 = sand.u32 %s72, 1
          %s395 = smul.addr %s394, 16
          %s396 = scalar_lea.vmem [#allocation8], %s395
          %397 = dma.done %s393, 256
        $region48: #{tpu_custom_call.1} parent=43 // pred_fallthru
          _
        // Predicated region
        $region49: #{tpu_custom_call.1} parent=43 // pred_check
          %p398 = pneg %p115
        $region50: #{tpu_custom_call.1} parent=43 // pred_check_branch
          %400 = sbr.rel (%p398) target = $region52
        $region51: #{tpu_custom_call.1} parent=43 // pred_region
          %s401 = sand.u32 %s100, 1
          %s402 = scalar_lea.sflag [#allocation10], %s401
          %s403 = sand.u32 %s100, 1
          %s404 = smul.addr %s403, 16
          %s405 = scalar_lea.vmem [#allocation9], %s404
          %406 = dma.done %s402, 256
        $region52: #{tpu_custom_call.1} parent=43 // pred_fallthru
          _
      $region44: #{tpu_custom_call.1} parent=5 // pred_fallthru
        _
    $region6: #{tpu_custom_call.1} parent=1 // loop_footer
      %s22 = sadd.s32 1, %s18
    $region7: #{tpu_custom_call.1} parent=1 // loop_footer_branch
      %17 = sbr.rel target = $region3
    $region8: #{tpu_custom_call.1} parent=1 // loop_exit
      _
    %407 = vsyncpa [#allocation6], 1
    %s408 = scalar_lea.sflag [#allocation6], 1
    %409 = vsyncpa %s408, 1
    %410 = vsyncpa [#allocation7], 1
    %s411 = scalar_lea.sflag [#allocation7], 1
    %412 = vsyncpa %s411, 1
    %413 = vsyncpa [#allocation10], 1
    %s414 = scalar_lea.sflag [#allocation10], 1
    %415 = vsyncpa %s414, 1

</llo_original>
